<compile_context>
chip_gen: v7x
topology: tpu7x:2x2x1
jax: 0.10.0
libtpu: 0.0.40
codegen_flags: <defaults>
</compile_context>

<pallas_src>
import functools

import jax
import jax.numpy as jnp
from jax.experimental import pallas as pl
from jax.experimental.pallas import tpu as pltpu


def _patch_shift_kernel(mask_ref, x_ref, o_ref, *, chw, shifts):
    # mask_ref: (4, CHW)   x_ref: (TB, CHW)   o_ref: (TB, 5*CHW)
    x = x_ref[...]
    masks = mask_ref[...]
    zero = jnp.zeros((), x.dtype)

    # Identity view: direct lane-dense slice store (no concatenate, no temp).
    o_ref[:, 0:chw] = x

    # Four diagonal views: flat lane-rotate + zero-fill of invalid positions.
    for slot, sh in enumerate(shifts):
        y = pltpu.roll(x, sh, axis=1)          # XLU lane rotation (static amount)
        m = masks[slot:slot + 1]               # (1, CHW) -> broadcast over TB rows
        lo = (slot + 1) * chw
        o_ref[:, lo:lo + chw] = jnp.where(m != zero, y, zero)


def _pick_tb(B, per_image_bytes, budget_bytes=8 << 20):
    """Images per grid step: big mem-bound blocks, >=2 steps, legal sublane tile."""
    fit = max(1, budget_bytes // max(per_image_bytes, 1))   # fits the VMEM budget
    half = max(1, (B + 1) // 2)                             # >= 2 grid steps (v7x: 2 TCs)
    tb = min(B, fit, half)
    # (8,128) block rule: the 2nd-minor block dim must be a multiple of 8
    # sublanes or span the full array dim.
    if tb != B and tb % 8:
        tb = (tb // 8) * 8 if tb > 8 else min(8, B)
    return max(1, min(tb, B))


def patch_shifting(x, patch_size):
    """Pallas TPU implementation of PatchShifting.forward.  x: (N, C, H, W)."""
    shift = int(patch_size * (1 / 2))
    if shift < 1:
        # Matches the PyTorch module's implicit assumption (patch_size >= 2).
        raise ValueError("patch_shifting requires patch_size >= 2 (shift >= 1)")

    B, C, H, W = x.shape
    if shift >= H or shift >= W:
        raise ValueError("patch_shifting requires shift < H and shift < W")

    s = shift
    HW = H * W
    CHW = C * HW
    item = x.dtype.itemsize

    # --- flat, lane-dense layout (free bitcast) ---------------------------
    xf = x.reshape(B, CHW)

    # --- grid-invariant validity masks (computed once, resident in VMEM) --
    sp = jnp.arange(HW, dtype=jnp.int32)
    h_idx, w_idx = sp // W, sp % W
    m = jnp.stack([
        (h_idx >= s) & (w_idx >= s),        # x_lu reads x[h-s, w-s]
        (h_idx >= s) & (w_idx < W - s),     # x_ru reads x[h-s, w+s]
        (h_idx < H - s) & (w_idx >= s),     # x_lb reads x[h+s, w-s]
        (h_idx < H - s) & (w_idx < W - s),  # x_rb reads x[h+s, w+s]
    ]).astype(x.dtype)
    masks = jnp.tile(m, (1, C))             # (4, C*HW): same spatial mask per channel

    # Flat roll amounts (jnp.roll convention: y[f] = x[f - d]); non-negative.
    shifts = tuple(d % CHW for d in
                   (s * W + s, s * W - s, -(s * W - s), -(s * W + s)))

    # --- tiling / VMEM budget ---------------------------------------------
    per_image = 6 * CHW * item              # 1x read + 5x write, exact (dense 2D)
    TB = _pick_tb(B, per_image)
    # TODO(synk): for single images larger than the VMEM budget (e.g. 3x1024x1024
    # f32), add a second grid axis over channels; not needed for typical shapes.
    block_bytes = TB * per_image
    mask_bytes = 8 * CHW * item             # sublane-padded (4 -> 8 rows)
    vmem_limit = 2 * block_bytes + 2 * mask_bytes + (4 << 20)   # double-buffered + slack
    vmem_limit = int(min(max(vmem_limit, 32 << 20), 48 << 20))  # v7x ceiling

    kernel = functools.partial(_patch_shift_kernel, chw=CHW, shifts=shifts)
    out2d = pl.pallas_call(
        kernel,
        out_shape=jax.ShapeDtypeStruct((B, 5 * CHW), x.dtype),
        grid=(pl.cdiv(B, TB),),                              # ragged batches OK
        in_specs=[
            pl.BlockSpec((4, CHW), lambda b: (0, 0)),        # masks: constant block
            pl.BlockSpec((TB, CHW), lambda b: (b, 0)),       # x
        ],
        out_specs=pl.BlockSpec((TB, 5 * CHW), lambda b: (b, 0)),
        compiler_params=pltpu.CompilerParams(
            dimension_semantics=("parallel",),
            vmem_limit_bytes=vmem_limit),
        cost_estimate=pl.CostEstimate(
            flops=0, transcendentals=0,
            bytes_accessed=int((6 * B + 4) * CHW * item)),
    )(masks, xf)

    return out2d.reshape(B, 5 * C, H, W)    # free bitcast, matches torch.cat order


def _reference(x, patch_size):
    """Plain-JAX reference mirroring the PyTorch code exactly."""
    s = int(patch_size * (1 / 2))
    x_pad = jnp.pad(x, ((0, 0), (0, 0), (s, s), (s, s)))
    x_lu = x_pad[:, :, :-s * 2, :-s * 2]
    x_ru = x_pad[:, :, :-s * 2, s * 2:]
    x_lb = x_pad[:, :, s * 2:, :-s * 2]
    x_rb = x_pad[:, :, s * 2:, s * 2:]
    return jnp.concatenate([x, x_lu, x_ru, x_lb, x_rb], axis=1)


if __name__ == "__main__":
    key = jax.random.PRNGKey(0)
    B, C, H, W = 2, 4, 16, 16
    patch_size = 2  # -> shift = 1

    x = jax.random.normal(key, (B, C, H, W), dtype=jnp.float32)

    out = jax.block_until_ready(patch_shifting(x, patch_size))

    ref = _reference(x, patch_size)
    assert out.shape == (B, 5 * C, H, W), out.shape
    assert jnp.allclose(out, ref, atol=1e-6, rtol=1e-6), "mismatch vs reference"

    print("KERNEL_OK")
</pallas_src>

<mosaic_0001>
module attributes {stable_mosaic.version = 11 : i64} {
  func.func @_patch_shift_kernel(%arg0: i32, %arg1: memref<4x1024xf32, #tpu.memory_space<vmem>>, %arg2: memref<2x1024xf32, #tpu.memory_space<vmem>>, %arg3: memref<2x5120xf32, #tpu.memory_space<vmem>>) attributes {dimension_semantics = [#tpu.dimension_semantics<parallel>], iteration_bounds = array<i64: 1>, scalar_prefetch = 0 : i64, scratch_operands = 0 : i64, tpu.core_type = #tpu.core_type<tc>, window_params = [{pipeline_mode = #tpu.pipeline_mode<synchronous>, transform_indices = @transform_0, window_bounds = array<i64: 4, 1024>}, {transform_indices = @transform_1, window_bounds = array<i64: 2, 1024>}, {transform_indices = @transform_2, window_bounds = array<i64: 2, 5120>}]} {
    %c0 = arith.constant 0 : index
    %c0_0 = arith.constant 0 : index
    %0 = vector.load %arg2[%c0, %c0_0] : memref<2x1024xf32, #tpu.memory_space<vmem>>, vector<2x1024xf32>
    %c0_1 = arith.constant 0 : index
    %c0_2 = arith.constant 0 : index
    %1 = vector.load %arg1[%c0_1, %c0_2] : memref<4x1024xf32, #tpu.memory_space<vmem>>, vector<4x1024xf32>
    %c0_3 = arith.constant 0 : index
    %c0_4 = arith.constant 0 : index
    %2 = vector.load %arg3[%c0_3, %c0_4] : memref<2x5120xf32, #tpu.memory_space<vmem>>, vector<2x1024xf32>
    tpu.vector_store %arg3[%c0_3, %c0_4], %0 {strides = array<i32>} : memref<2x5120xf32, #tpu.memory_space<vmem>>, vector<2x1024xf32>,
    %c17_i32 = arith.constant 17 : i32
    %3 = tpu.dynamic_rotate %0 by %c17_i32 dim 1 : vector<2x1024xf32>, i32 -> vector<2x1024xf32>
    %4 = vector.extract_strided_slice %1 {offsets = [0, 0], sizes = [1, 1024], strides = [1, 1]} : vector<4x1024xf32> to vector<1x1024xf32>
    %cst = arith.constant 0.000000e+00 : f32
    %5 = vector.broadcast %cst : f32 to vector<1x1024xf32>
    %6 = arith.cmpf one, %4, %5 : vector<1x1024xf32>
    %cst_5 = arith.constant 0.000000e+00 : f32
    %7 = vector.shape_cast %6 : vector<1x1024xi1> to vector<1x1024xi1>
    %8 = vector.broadcast %7 : vector<1x1024xi1> to vector<2x1024xi1>
    %9 = vector.broadcast %cst_5 : f32 to vector<2x1024xf32>
    %10 = arith.select %8, %3, %9 : vector<2x1024xi1>, vector<2x1024xf32>
    %c0_6 = arith.constant 0 : index
    %c1024 = arith.constant 1024 : index
    %11 = vector.load %arg3[%c0_6, %c1024] : memref<2x5120xf32, #tpu.memory_space<vmem>>, vector<2x1024xf32>
    tpu.vector_store %arg3[%c0_6, %c1024], %10 {strides = array<i32>} : memref<2x5120xf32, #tpu.memory_space<vmem>>, vector<2x1024xf32>,
    %c15_i32 = arith.constant 15 : i32
    %12 = tpu.dynamic_rotate %0 by %c15_i32 dim 1 : vector<2x1024xf32>, i32 -> vector<2x1024xf32>
    %13 = vector.extract_strided_slice %1 {offsets = [1, 0], sizes = [1, 1024], strides = [1, 1]} : vector<4x1024xf32> to vector<1x1024xf32>
    %cst_7 = arith.constant 0.000000e+00 : f32
    %14 = vector.broadcast %cst_7 : f32 to vector<1x1024xf32>
    %15 = arith.cmpf one, %13, %14 : vector<1x1024xf32>
    %cst_8 = arith.constant 0.000000e+00 : f32
    %16 = vector.shape_cast %15 : vector<1x1024xi1> to vector<1x1024xi1>
    %17 = vector.broadcast %16 : vector<1x1024xi1> to vector<2x1024xi1>
    %18 = vector.broadcast %cst_8 : f32 to vector<2x1024xf32>
    %19 = arith.select %17, %12, %18 : vector<2x1024xi1>, vector<2x1024xf32>
    %c0_9 = arith.constant 0 : index
    %c2048 = arith.constant 2048 : index
    %20 = vector.load %arg3[%c0_9, %c2048] : memref<2x5120xf32, #tpu.memory_space<vmem>>, vector<2x1024xf32>
    tpu.vector_store %arg3[%c0_9, %c2048], %19 {strides = array<i32>} : memref<2x5120xf32, #tpu.memory_space<vmem>>, vector<2x1024xf32>,
    %c1009_i32 = arith.constant 1009 : i32
    %21 = tpu.dynamic_rotate %0 by %c1009_i32 dim 1 : vector<2x1024xf32>, i32 -> vector<2x1024xf32>
    %22 = vector.extract_strided_slice %1 {offsets = [2, 0], sizes = [1, 1024], strides = [1, 1]} : vector<4x1024xf32> to vector<1x1024xf32>
    %cst_10 = arith.constant 0.000000e+00 : f32
    %23 = vector.broadcast %cst_10 : f32 to vector<1x1024xf32>
    %24 = arith.cmpf one, %22, %23 : vector<1x1024xf32>
    %cst_11 = arith.constant 0.000000e+00 : f32
    %25 = vector.shape_cast %24 : vector<1x1024xi1> to vector<1x1024xi1>
    %26 = vector.broadcast %25 : vector<1x1024xi1> to vector<2x1024xi1>
    %27 = vector.broadcast %cst_11 : f32 to vector<2x1024xf32>
    %28 = arith.select %26, %21, %27 : vector<2x1024xi1>, vector<2x1024xf32>
    %c0_12 = arith.constant 0 : index
    %c3072 = arith.constant 3072 : index
    %29 = vector.load %arg3[%c0_12, %c3072] : memref<2x5120xf32, #tpu.memory_space<vmem>>, vector<2x1024xf32>
    tpu.vector_store %arg3[%c0_12, %c3072], %28 {strides = array<i32>} : memref<2x5120xf32, #tpu.memory_space<vmem>>, vector<2x1024xf32>,
    %c1007_i32 = arith.constant 1007 : i32
    %30 = tpu.dynamic_rotate %0 by %c1007_i32 dim 1 : vector<2x1024xf32>, i32 -> vector<2x1024xf32>
    %31 = vector.extract_strided_slice %1 {offsets = [3, 0], sizes = [1, 1024], strides = [1, 1]} : vector<4x1024xf32> to vector<1x1024xf32>
    %cst_13 = arith.constant 0.000000e+00 : f32
    %32 = vector.broadcast %cst_13 : f32 to vector<1x1024xf32>
    %33 = arith.cmpf one, %31, %32 : vector<1x1024xf32>
    %cst_14 = arith.constant 0.000000e+00 : f32
    %34 = vector.shape_cast %33 : vector<1x1024xi1> to vector<1x1024xi1>
    %35 = vector.broadcast %34 : vector<1x1024xi1> to vector<2x1024xi1>
    %36 = vector.broadcast %cst_14 : f32 to vector<2x1024xf32>
    %37 = arith.select %35, %30, %36 : vector<2x1024xi1>, vector<2x1024xf32>
    %c0_15 = arith.constant 0 : index
    %c4096 = arith.constant 4096 : index
    %38 = vector.load %arg3[%c0_15, %c4096] : memref<2x5120xf32, #tpu.memory_space<vmem>>, vector<2x1024xf32>
    tpu.vector_store %arg3[%c0_15, %c4096], %37 {strides = array<i32>} : memref<2x5120xf32, #tpu.memory_space<vmem>>, vector<2x1024xf32>,
    return
  }
  func.func @transform_0(%arg0: i32) -> (i32, i32) {
    %c0_i32 = arith.constant 0 : i32
    %c0_i32_0 = arith.constant 0 : i32
    %c0_i32_1 = arith.constant 0 : i32
    return %c0_i32, %c0_i32_0 : i32, i32
  }
  func.func @transform_1(%arg0: i32) -> (i32, i32) {
    %c0_i32 = arith.constant 0 : i32
    %c0_i32_0 = arith.constant 0 : i32
    return %arg0, %c0_i32 : i32, i32
  }
  func.func @transform_2(%arg0: i32) -> (i32, i32) {
    %c0_i32 = arith.constant 0 : i32
    %c0_i32_0 = arith.constant 0 : i32
    return %arg0, %c0_i32 : i32, i32
  }
}

</mosaic_0001>

<llo_original>
// kernel: tpu_custom_call.1
$region0: #{tpu_custom_call.1}
  #allocation0 [shape = 'u32[]', space=smem, size = 0x4, offset = 0x4, fixed_abs, tag = 'smem constant byte address 0x4 - core index']
  #allocation1 [shape = 'u32[144,128]{1,0:T(1,128)}', space=vmem, size = 0x12000, scoped, tag = 'internal scratch']
  %s0 = inlined_call_operand.hbm [shape: f32[4,1024], index: 0, kind: input, shape index: {}]
  %s1 = inlined_call_operand.hbm [shape: f32[2,1024], index: 1, kind: input, shape index: {}]
  %s2 = inlined_call_operand.hbm [shape: f32[2,5120], index: 2, kind: output, shape index: {}]
  %s3 = sld [smem:[#allocation0]]
  $region26: #{tpu_custom_call.1} parent=0
    _
  %s5 = ssub.s32 1, %s3
  %s6 = scalar_select 0, %s5, %s3
  $region1: #{tpu_custom_call.1} parent=0
    #allocation2 [shape = 'u8[16384]{0}', space=vmem, size = 0x4000, scoped, tag = 'input window, operand 0, single buffered']
    #allocation3 [shape = 's32[1]{0}', space=sflag, size = 0x4, scoped, tag = 'scoped memory for tpu_custom_call.1']
    #allocation4 [shape = 's32[1]{0}', space=sflag, size = 0x4, scoped, tag = 'scoped memory for tpu_custom_call.1']
    #allocation5 [shape = 'u8[8192]{0}', space=vmem, size = 0x2000, scoped, tag = 'input window, operand 1, single buffered']
    #allocation6 [shape = 's32[1]{0}', space=sflag, size = 0x4, scoped, tag = 'scoped memory for tpu_custom_call.1']
    #allocation7 [shape = 'u8[40960]{0}', space=vmem, size = 0xa000, scoped, tag = 'output window, operand 0, single buffered']
    %7 = vsyncpa [#allocation3], 0
    %8 = vsyncpa [#allocation6], 0
    %9 = vsyncpa [#allocation4], 0
    // Predicated region
    $region2: #{tpu_custom_call.1} parent=1 // pred_check
      _
    $region3: #{tpu_custom_call.1} parent=1 // pred_check_branch
      %11 = sbr.rel (0) target = $region5
    $region4: #{tpu_custom_call.1} parent=1 // pred_region
      %s13 = ssub.s32 512, 512
      %14 = vsyncadd [#allocation3], %s13
      %s16 = sshll.u32 [#allocation2], 4
      %s17 = int_to_ptr.vmem [resolvable:$true] %s16
      %19 = dma.hbm_to_vmem [thread:$0]  %s0, 512, %s17, [#allocation3]
    $region5: #{tpu_custom_call.1} parent=1 // pred_fallthru
      _
    // Predicated region
    $region6: #{tpu_custom_call.1} parent=1 // pred_check
      _
    $region7: #{tpu_custom_call.1} parent=1 // pred_check_branch
      %21 = sbr.rel (0) target = $region9
    $region8: #{tpu_custom_call.1} parent=1 // pred_region
      %s23 = ssub.s32 256, 256
      %24 = vsyncadd [#allocation6], %s23
      %s26 = sshll.u32 [#allocation5], 4
      %s27 = int_to_ptr.vmem [resolvable:$true] %s26
      %29 = dma.hbm_to_vmem [thread:$0]  %s1, 256, %s27, [#allocation6]
    $region9: #{tpu_custom_call.1} parent=1 // pred_fallthru
      _
    // Predicated region
    $region10: #{tpu_custom_call.1} parent=1 // pred_check
      _
    $region11: #{tpu_custom_call.1} parent=1 // pred_check_branch
      %31 = sbr.rel (0) target = $region13
    $region12: #{tpu_custom_call.1} parent=1 // pred_region
      %32 = dma.done [#allocation3], 512
    $region13: #{tpu_custom_call.1} parent=1 // pred_fallthru
      _
    // Predicated region
    $region14: #{tpu_custom_call.1} parent=1 // pred_check
      _
    $region15: #{tpu_custom_call.1} parent=1 // pred_check_branch
      %34 = sbr.rel (0) target = $region17
    $region16: #{tpu_custom_call.1} parent=1 // pred_region
      %35 = dma.done [#allocation6], 256
    $region17: #{tpu_custom_call.1} parent=1 // pred_fallthru
      _
    %v36 = vld [vmem:[#allocation5] sm:$0xff]
    %v37 = vld [vmem:[#allocation5 + $0x8] sm:$0xff]
    %v38 = vld [vmem:[#allocation2] sm:$0xff]
    %v39 = vld [vmem:[#allocation2 + $0x8] sm:$0xff]
    %v40 = vld [vmem:[#allocation2 + $0x10] sm:$0xff]
    %v41 = vld [vmem:[#allocation2 + $0x18] sm:$0xff]
    %42 = vst [vmem:[#allocation7] sm:$0xff] %v36
    %43 = vst [vmem:[#allocation7 + $0x8] sm:$0xff] %v37
    %v46 = vcombine.high %v36, %v36
    %v48 = vunpack.c.l.s4 1983009808
    %v49 = vunpack.c.0.s8 %v48
    %v50 = vlaneseq
    %v51 = vshrl.u32 %v50, 7
    %v52 = vsub.s32 %v49, %v51
    %v53 = vrot.slane %v36, %v52
    %v55 = vunpack.c.l.s4 1983009808
    %v56 = vunpack.c.0.s8 %v55
    %v57 = vlaneseq
    %v58 = vshrl.u32 %v57, 7
    %v59 = vsub.s32 %v56, %v58
    %v60 = vrot.slane %v46, %v59
    %v61 = vcombine.high %v53, %v53
    %v62 = vcombine.high %v60, %v60
    %v63 = vcombine.high %v37, %v37
    %v65 = vunpack.c.l.s4 1983009808
    %v66 = vunpack.c.0.s8 %v65
    %v67 = vlaneseq
    %v68 = vshrl.u32 %v67, 7
    %v69 = vsub.s32 %v66, %v68
    %v70 = vrot.slane %v37, %v69
    %v72 = vunpack.c.l.s4 1983009808
    %v73 = vunpack.c.0.s8 %v72
    %v74 = vlaneseq
    %v75 = vshrl.u32 %v74, 7
    %v76 = vsub.s32 %v73, %v75
    %v77 = vrot.slane %v63, %v76
    %v78 = vcombine.high %v70, %v70
    %v79 = vcombine.high %v77, %v77
    %88 = vrot.lane.b32.xlu0 %v53, 17
    %v89 = vpop.permute.xlu0 %88
    %90 = vrot.lane.b32.xlu0 %v61, 17
    %v91 = vpop.permute.xlu0 %90
    %92 = vrot.lane.b32.xlu0 %v60, 17
    %v93 = vpop.permute.xlu0 %92
    %94 = vrot.lane.b32.xlu0 %v62, 17
    %v95 = vpop.permute.xlu0 %94
    %96 = vrot.lane.b32.xlu0 %v70, 17
    %v97 = vpop.permute.xlu0 %96
    %98 = vrot.lane.b32.xlu0 %v78, 17
    %v99 = vpop.permute.xlu0 %98
    %100 = vrot.lane.b32.xlu0 %v77, 17
    %v101 = vpop.permute.xlu0 %100
    %102 = vrot.lane.b32.xlu0 %v79, 17
    %v103 = vpop.permute.xlu0 %102
    %v104 = vlaneseq
    %v105 = vand.u32 %v104, 127
    %vm106 = vcmp.lt.s32.totalorder %v105, 17
    %v107 = vsel %vm106, %v101, %v103
    %v108 = vsel %vm106, %v99, %v101
    %v109 = vsel %vm106, %v97, %v99
    %v110 = vsel %vm106, %v95, %v97
    %v111 = vsel %vm106, %v93, %v95
    %v112 = vsel %vm106, %v91, %v93
    %v113 = vsel %vm106, %v89, %v91
    %v114 = vsel %vm106, %v103, %v89
    %vm115 = vcmp.ne.f32.partialorder %v38, 0.0
    %vm116 = vcmp.ne.f32.partialorder %v39, 0.0
    %vm117 = vcmp.ne.f32.partialorder %v40, 0.0
    %vm118 = vcmp.ne.f32.partialorder %v41, 0.0
    %v119 = vsel %vm115, 1, 0
    %v120 = vsel %vm116, 1, 0
    %v121 = vsel %vm117, 1, 0
    %v122 = vsel %vm118, 1, 0
    %v123 = vlaneseq
    %v124 = vshrl.u32 %v123, 7
    %v125 = vsub.s32 0, %v124
    %v126 = vrot.slane %v119, %v125
    %v127 = vlaneseq
    %v128 = vshrl.u32 %v127, 7
    %v129 = vsub.s32 4, %v128
    %v130 = vrot.slane %v119, %v129
    %v131 = vlaneseq
    %v132 = vshrl.u32 %v131, 7
    %v133 = vsub.s32 0, %v132
    %v134 = vrot.slane %v120, %v133
    %v135 = vlaneseq
    %v136 = vshrl.u32 %v135, 7
    %v137 = vsub.s32 4, %v136
    %v138 = vrot.slane %v120, %v137
    %v139 = vlaneseq
    %v140 = vshrl.u32 %v139, 7
    %v141 = vsub.s32 0, %v140
    %v142 = vrot.slane %v121, %v141
    %v143 = vlaneseq
    %v144 = vshrl.u32 %v143, 7
    %v145 = vsub.s32 4, %v144
    %v146 = vrot.slane %v121, %v145
    %v147 = vlaneseq
    %v148 = vshrl.u32 %v147, 7
    %v149 = vsub.s32 0, %v148
    %v150 = vrot.slane %v122, %v149
    %v151 = vlaneseq
    %v152 = vshrl.u32 %v151, 7
    %v153 = vsub.s32 4, %v152
    %v154 = vrot.slane %v122, %v153
    %v155 = vlaneseq
    %v156 = vshrl.u32 %v155, 7
    %v157 = vsub.s32 0, %v156
    %v158 = vrot.slane %v126, %v157
    %v159 = vlaneseq
    %v160 = vshrl.u32 %v159, 7
    %v161 = vsub.s32 0, %v160
    %v162 = vrot.slane %v130, %v161
    %v163 = vlaneseq
    %v164 = vshrl.u32 %v163, 7
    %v165 = vsub.s32 0, %v164
    %v166 = vrot.slane %v134, %v165
    %v167 = vlaneseq
    %v168 = vshrl.u32 %v167, 7
    %v169 = vsub.s32 0, %v168
    %v170 = vrot.slane %v138, %v169
    %v171 = vlaneseq
    %v172 = vshrl.u32 %v171, 7
    %v173 = vsub.s32 0, %v172
    %v174 = vrot.slane %v142, %v173
    %v175 = vlaneseq
    %v176 = vshrl.u32 %v175, 7
    %v177 = vsub.s32 0, %v176
    %v178 = vrot.slane %v146, %v177
    %v179 = vlaneseq
    %v180 = vshrl.u32 %v179, 7
    %v181 = vsub.s32 0, %v180
    %v182 = vrot.slane %v150, %v181
    %v183 = vlaneseq
    %v184 = vshrl.u32 %v183, 7
    %v185 = vsub.s32 0, %v184
    %v186 = vrot.slane %v154, %v185
    %vm187 = vcmp.eq.s32.totalorder %v158, 1
    %vm188 = vcmp.eq.s32.totalorder %v162, 1
    %vm189 = vcmp.eq.s32.totalorder %v166, 1
    %vm190 = vcmp.eq.s32.totalorder %v170, 1
    %vm191 = vcmp.eq.s32.totalorder %v174, 1
    %vm192 = vcmp.eq.s32.totalorder %v178, 1
    %vm193 = vcmp.eq.s32.totalorder %v182, 1
    %vm194 = vcmp.eq.s32.totalorder %v186, 1
    %v195 = vsel %vm187, %v114, 0.0
    %v196 = vsel %vm188, %v113, 0.0
    %v197 = vsel %vm189, %v112, 0.0
    %v198 = vsel %vm190, %v111, 0.0
    %v199 = vsel %vm191, %v110, 0.0
    %v200 = vsel %vm192, %v109, 0.0
    %v201 = vsel %vm193, %v108, 0.0
    %v202 = vsel %vm194, %v107, 0.0
    %v211 = vcombine.low %v195, %v196
    %v212 = vcombine.low %v197, %v198
    %v214 = vunpack.c.l.s4 1983009808
    %v215 = vunpack.c.0.s8 %v214
    %v216 = vlaneseq
    %v217 = vshrl.u32 %v216, 7
    %v218 = vsub.s32 %v215, %v217
    %v219 = vrot.slane %v211, %v218
    %v221 = vunpack.c.l.s4 1983009808
    %v222 = vunpack.c.0.s8 %v221
    %v223 = vlaneseq
    %v224 = vshrl.u32 %v223, 7
    %v225 = vsub.s32 %v222, %v224
    %v226 = vrot.slane %v212, %v225
    %v227 = vcombine.low %v219, %v226
    %v228 = vcombine.low %v199, %v200
    %v229 = vcombine.low %v201, %v202
    %v231 = vunpack.c.l.s4 1983009808
    %v232 = vunpack.c.0.s8 %v231
    %v233 = vlaneseq
    %v234 = vshrl.u32 %v233, 7
    %v235 = vsub.s32 %v232, %v234
    %v236 = vrot.slane %v228, %v235
    %v238 = vunpack.c.l.s4 1983009808
    %v239 = vunpack.c.0.s8 %v238
    %v240 = vlaneseq
    %v241 = vshrl.u32 %v240, 7
    %v242 = vsub.s32 %v239, %v241
    %v243 = vrot.slane %v229, %v242
    %v244 = vcombine.low %v236, %v243
    %247 = vst [vmem:[#allocation7 + $0x10] sm:$0xff] %v227
    %248 = vst [vmem:[#allocation7 + $0x18] sm:$0xff] %v244
    %249 = vrot.lane.b32.xlu0 %v53, 15
    %v250 = vpop.permute.xlu0 %249
    %251 = vrot.lane.b32.xlu0 %v61, 15
    %v252 = vpop.permute.xlu0 %251
    %253 = vrot.lane.b32.xlu0 %v60, 15
    %v254 = vpop.permute.xlu0 %253
    %255 = vrot.lane.b32.xlu0 %v62, 15
    %v256 = vpop.permute.xlu0 %255
    %257 = vrot.lane.b32.xlu0 %v70, 15
    %v258 = vpop.permute.xlu0 %257
    %259 = vrot.lane.b32.xlu0 %v78, 15
    %v260 = vpop.permute.xlu0 %259
    %261 = vrot.lane.b32.xlu0 %v77, 15
    %v262 = vpop.permute.xlu0 %261
    %263 = vrot.lane.b32.xlu0 %v79, 15
    %v264 = vpop.permute.xlu0 %263
    %vm265 = vcmp.lt.s32.totalorder %v105, 15
    %v266 = vsel %vm265, %v262, %v264
    %v267 = vsel %vm265, %v260, %v262
    %v268 = vsel %vm265, %v258, %v260
    %v269 = vsel %vm265, %v256, %v258
    %v270 = vsel %vm265, %v254, %v256
    %v271 = vsel %vm265, %v252, %v254
    %v272 = vsel %vm265, %v250, %v252
    %v273 = vsel %vm265, %v264, %v250
    %v274 = vlaneseq
    %v275 = vshrl.u32 %v274, 7
    %v276 = vsub.s32 1, %v275
    %v277 = vrot.slane %v119, %v276
    %v278 = vlaneseq
    %v279 = vshrl.u32 %v278, 7
    %v280 = vsub.s32 5, %v279
    %v281 = vrot.slane %v119, %v280
    %v282 = vlaneseq
    %v283 = vshrl.u32 %v282, 7
    %v284 = vsub.s32 1, %v283
    %v285 = vrot.slane %v120, %v284
    %v286 = vlaneseq
    %v287 = vshrl.u32 %v286, 7
    %v288 = vsub.s32 5, %v287
    %v289 = vrot.slane %v120, %v288
    %v290 = vlaneseq
    %v291 = vshrl.u32 %v290, 7
    %v292 = vsub.s32 1, %v291
    %v293 = vrot.slane %v121, %v292
    %v294 = vlaneseq
    %v295 = vshrl.u32 %v294, 7
    %v296 = vsub.s32 5, %v295
    %v297 = vrot.slane %v121, %v296
    %v298 = vlaneseq
    %v299 = vshrl.u32 %v298, 7
    %v300 = vsub.s32 1, %v299
    %v301 = vrot.slane %v122, %v300
    %v302 = vlaneseq
    %v303 = vshrl.u32 %v302, 7
    %v304 = vsub.s32 5, %v303
    %v305 = vrot.slane %v122, %v304
    %v306 = vlaneseq
    %v307 = vshrl.u32 %v306, 7
    %v308 = vsub.s32 1, %v307
    %v309 = vrot.slane %v277, %v308
    %v310 = vlaneseq
    %v311 = vshrl.u32 %v310, 7
    %v312 = vsub.s32 1, %v311
    %v313 = vrot.slane %v281, %v312
    %v314 = vlaneseq
    %v315 = vshrl.u32 %v314, 7
    %v316 = vsub.s32 1, %v315
    %v317 = vrot.slane %v285, %v316
    %v318 = vlaneseq
    %v319 = vshrl.u32 %v318, 7
    %v320 = vsub.s32 1, %v319
    %v321 = vrot.slane %v289, %v320
    %v322 = vlaneseq
    %v323 = vshrl.u32 %v322, 7
    %v324 = vsub.s32 1, %v323
    %v325 = vrot.slane %v293, %v324
    %v326 = vlaneseq
    %v327 = vshrl.u32 %v326, 7
    %v328 = vsub.s32 1, %v327
    %v329 = vrot.slane %v297, %v328
    %v330 = vlaneseq
    %v331 = vshrl.u32 %v330, 7
    %v332 = vsub.s32 1, %v331
    %v333 = vrot.slane %v301, %v332
    %v334 = vlaneseq
    %v335 = vshrl.u32 %v334, 7
    %v336 = vsub.s32 1, %v335
    %v337 = vrot.slane %v305, %v336
    %vm338 = vcmp.eq.s32.totalorder %v309, 1
    %vm339 = vcmp.eq.s32.totalorder %v313, 1
    %vm340 = vcmp.eq.s32.totalorder %v317, 1
    %vm341 = vcmp.eq.s32.totalorder %v321, 1
    %vm342 = vcmp.eq.s32.totalorder %v325, 1
    %vm343 = vcmp.eq.s32.totalorder %v329, 1
    %vm344 = vcmp.eq.s32.totalorder %v333, 1
    %vm345 = vcmp.eq.s32.totalorder %v337, 1
    %v346 = vsel %vm338, %v273, 0.0
    %v347 = vsel %vm339, %v272, 0.0
    %v348 = vsel %vm340, %v271, 0.0
    %v349 = vsel %vm341, %v270, 0.0
    %v350 = vsel %vm342, %v269, 0.0
    %v351 = vsel %vm343, %v268, 0.0
    %v352 = vsel %vm344, %v267, 0.0
    %v353 = vsel %vm345, %v266, 0.0
    %v362 = vcombine.low %v346, %v347
    %v363 = vcombine.low %v348, %v349
    %v365 = vunpack.c.l.s4 1983009808
    %v366 = vunpack.c.0.s8 %v365
    %v367 = vlaneseq
    %v368 = vshrl.u32 %v367, 7
    %v369 = vsub.s32 %v366, %v368
    %v370 = vrot.slane %v362, %v369
    %v372 = vunpack.c.l.s4 1983009808
    %v373 = vunpack.c.0.s8 %v372
    %v374 = vlaneseq
    %v375 = vshrl.u32 %v374, 7
    %v376 = vsub.s32 %v373, %v375
    %v377 = vrot.slane %v363, %v376
    %v378 = vcombine.low %v370, %v377
    %v379 = vcombine.low %v350, %v351
    %v380 = vcombine.low %v352, %v353
    %v382 = vunpack.c.l.s4 1983009808
    %v383 = vunpack.c.0.s8 %v382
    %v384 = vlaneseq
    %v385 = vshrl.u32 %v384, 7
    %v386 = vsub.s32 %v383, %v385
    %v387 = vrot.slane %v379, %v386
    %v389 = vunpack.c.l.s4 1983009808
    %v390 = vunpack.c.0.s8 %v389
    %v391 = vlaneseq
    %v392 = vshrl.u32 %v391, 7
    %v393 = vsub.s32 %v390, %v392
    %v394 = vrot.slane %v380, %v393
    %v395 = vcombine.low %v387, %v394
    %398 = vst [vmem:[#allocation7 + $0x20] sm:$0xff] %v378
    %399 = vst [vmem:[#allocation7 + $0x28] sm:$0xff] %v395
    %400 = vrot.lane.b32.xlu0 %v53, 113
    %v401 = vpop.permute.xlu0 %400
    %402 = vrot.lane.b32.xlu0 %v61, 113
    %v403 = vpop.permute.xlu0 %402
    %404 = vrot.lane.b32.xlu0 %v60, 113
    %v405 = vpop.permute.xlu0 %404
    %406 = vrot.lane.b32.xlu0 %v62, 113
    %v407 = vpop.permute.xlu0 %406
    %408 = vrot.lane.b32.xlu0 %v70, 113
    %v409 = vpop.permute.xlu0 %408
    %410 = vrot.lane.b32.xlu0 %v78, 113
    %v411 = vpop.permute.xlu0 %410
    %412 = vrot.lane.b32.xlu0 %v77, 113
    %v413 = vpop.permute.xlu0 %412
    %414 = vrot.lane.b32.xlu0 %v79, 113
    %v415 = vpop.permute.xlu0 %414
    %vm416 = vcmp.lt.s32.totalorder %v105, 113
    %v417 = vsel %vm416, %v413, %v415
    %v418 = vsel %vm416, %v411, %v413
    %v419 = vsel %vm416, %v409, %v411
    %v420 = vsel %vm416, %v407, %v409
    %v421 = vsel %vm416, %v405, %v407
    %v422 = vsel %vm416, %v403, %v405
    %v423 = vsel %vm416, %v401, %v403
    %v424 = vsel %vm416, %v415, %v401
    %v425 = vlaneseq
    %v426 = vshrl.u32 %v425, 7
    %v427 = vsub.s32 2, %v426
    %v428 = vrot.slane %v119, %v427
    %v429 = vlaneseq
    %v430 = vshrl.u32 %v429, 7
    %v431 = vsub.s32 6, %v430
    %v432 = vrot.slane %v119, %v431
    %v433 = vlaneseq
    %v434 = vshrl.u32 %v433, 7
    %v435 = vsub.s32 2, %v434
    %v436 = vrot.slane %v120, %v435
    %v437 = vlaneseq
    %v438 = vshrl.u32 %v437, 7
    %v439 = vsub.s32 6, %v438
    %v440 = vrot.slane %v120, %v439
    %v441 = vlaneseq
    %v442 = vshrl.u32 %v441, 7
    %v443 = vsub.s32 2, %v442
    %v444 = vrot.slane %v121, %v443
    %v445 = vlaneseq
    %v446 = vshrl.u32 %v445, 7
    %v447 = vsub.s32 6, %v446
    %v448 = vrot.slane %v121, %v447
    %v449 = vlaneseq
    %v450 = vshrl.u32 %v449, 7
    %v451 = vsub.s32 2, %v450
    %v452 = vrot.slane %v122, %v451
    %v453 = vlaneseq
    %v454 = vshrl.u32 %v453, 7
    %v455 = vsub.s32 6, %v454
    %v456 = vrot.slane %v122, %v455
    %v457 = vlaneseq
    %v458 = vshrl.u32 %v457, 7
    %v459 = vsub.s32 2, %v458
    %v460 = vrot.slane %v428, %v459
    %v461 = vlaneseq
    %v462 = vshrl.u32 %v461, 7
    %v463 = vsub.s32 2, %v462
    %v464 = vrot.slane %v432, %v463
    %v465 = vlaneseq
    %v466 = vshrl.u32 %v465, 7
    %v467 = vsub.s32 2, %v466
    %v468 = vrot.slane %v436, %v467
    %v469 = vlaneseq
    %v470 = vshrl.u32 %v469, 7
    %v471 = vsub.s32 2, %v470
    %v472 = vrot.slane %v440, %v471
    %v473 = vlaneseq
    %v474 = vshrl.u32 %v473, 7
    %v475 = vsub.s32 2, %v474
    %v476 = vrot.slane %v444, %v475
    %v477 = vlaneseq
    %v478 = vshrl.u32 %v477, 7
    %v479 = vsub.s32 2, %v478
    %v480 = vrot.slane %v448, %v479
    %v481 = vlaneseq
    %v482 = vshrl.u32 %v481, 7
    %v483 = vsub.s32 2, %v482
    %v484 = vrot.slane %v452, %v483
    %v485 = vlaneseq
    %v486 = vshrl.u32 %v485, 7
    %v487 = vsub.s32 2, %v486
    %v488 = vrot.slane %v456, %v487
    %vm489 = vcmp.eq.s32.totalorder %v460, 1
    %vm490 = vcmp.eq.s32.totalorder %v464, 1
    %vm491 = vcmp.eq.s32.totalorder %v468, 1
    %vm492 = vcmp.eq.s32.totalorder %v472, 1
    %vm493 = vcmp.eq.s32.totalorder %v476, 1
    %vm494 = vcmp.eq.s32.totalorder %v480, 1
    %vm495 = vcmp.eq.s32.totalorder %v484, 1
    %vm496 = vcmp.eq.s32.totalorder %v488, 1
    %v497 = vsel %vm489, %v423, 0.0
    %v498 = vsel %vm490, %v422, 0.0
    %v499 = vsel %vm491, %v421, 0.0
    %v500 = vsel %vm492, %v420, 0.0
    %v501 = vsel %vm493, %v419, 0.0
    %v502 = vsel %vm494, %v418, 0.0
    %v503 = vsel %vm495, %v417, 0.0
    %v504 = vsel %vm496, %v424, 0.0
    %v513 = vcombine.low %v497, %v498
    %v514 = vcombine.low %v499, %v500
    %v516 = vunpack.c.l.s4 1983009808
    %v517 = vunpack.c.0.s8 %v516
    %v518 = vlaneseq
    %v519 = vshrl.u32 %v518, 7
    %v520 = vsub.s32 %v517, %v519
    %v521 = vrot.slane %v513, %v520
    %v523 = vunpack.c.l.s4 1983009808
    %v524 = vunpack.c.0.s8 %v523
    %v525 = vlaneseq
    %v526 = vshrl.u32 %v525, 7
    %v527 = vsub.s32 %v524, %v526
    %v528 = vrot.slane %v514, %v527
    %v529 = vcombine.low %v521, %v528
    %v530 = vcombine.low %v501, %v502
    %v531 = vcombine.low %v503, %v504
    %v533 = vunpack.c.l.s4 1983009808
    %v534 = vunpack.c.0.s8 %v533
    %v535 = vlaneseq
    %v536 = vshrl.u32 %v535, 7
    %v537 = vsub.s32 %v534, %v536
    %v538 = vrot.slane %v530, %v537
    %v540 = vunpack.c.l.s4 1983009808
    %v541 = vunpack.c.0.s8 %v540
    %v542 = vlaneseq
    %v543 = vshrl.u32 %v542, 7
    %v544 = vsub.s32 %v541, %v543
    %v545 = vrot.slane %v531, %v544
    %v546 = vcombine.low %v538, %v545
    %549 = vst [vmem:[#allocation7 + $0x30] sm:$0xff] %v529
    %550 = vst [vmem:[#allocation7 + $0x38] sm:$0xff] %v546
    %551 = vrot.lane.b32.xlu0 %v53, 111
    %v552 = vpop.permute.xlu0 %551
    %553 = vrot.lane.b32.xlu0 %v61, 111
    %v554 = vpop.permute.xlu0 %553
    %555 = vrot.lane.b32.xlu0 %v60, 111
    %v556 = vpop.permute.xlu0 %555
    %557 = vrot.lane.b32.xlu0 %v62, 111
    %v558 = vpop.permute.xlu0 %557
    %559 = vrot.lane.b32.xlu0 %v70, 111
    %v560 = vpop.permute.xlu0 %559
    %561 = vrot.lane.b32.xlu0 %v78, 111
    %v562 = vpop.permute.xlu0 %561
    %563 = vrot.lane.b32.xlu0 %v77, 111
    %v564 = vpop.permute.xlu0 %563
    %565 = vrot.lane.b32.xlu0 %v79, 111
    %v566 = vpop.permute.xlu0 %565
    %vm567 = vcmp.lt.s32.totalorder %v105, 111
    %v568 = vsel %vm567, %v564, %v566
    %v569 = vsel %vm567, %v562, %v564
    %v570 = vsel %vm567, %v560, %v562
    %v571 = vsel %vm567, %v558, %v560
    %v572 = vsel %vm567, %v556, %v558
    %v573 = vsel %vm567, %v554, %v556
    %v574 = vsel %vm567, %v552, %v554
    %v575 = vsel %vm567, %v566, %v552
    %v576 = vlaneseq
    %v577 = vshrl.u32 %v576, 7
    %v578 = vsub.s32 3, %v577
    %v579 = vrot.slane %v119, %v578
    %v580 = vlaneseq
    %v581 = vshrl.u32 %v580, 7
    %v582 = vsub.s32 7, %v581
    %v583 = vrot.slane %v119, %v582
    %v584 = vlaneseq
    %v585 = vshrl.u32 %v584, 7
    %v586 = vsub.s32 3, %v585
    %v587 = vrot.slane %v120, %v586
    %v588 = vlaneseq
    %v589 = vshrl.u32 %v588, 7
    %v590 = vsub.s32 7, %v589
    %v591 = vrot.slane %v120, %v590
    %v592 = vlaneseq
    %v593 = vshrl.u32 %v592, 7
    %v594 = vsub.s32 3, %v593
    %v595 = vrot.slane %v121, %v594
    %v596 = vlaneseq
    %v597 = vshrl.u32 %v596, 7
    %v598 = vsub.s32 7, %v597
    %v599 = vrot.slane %v121, %v598
    %v600 = vlaneseq
    %v601 = vshrl.u32 %v600, 7
    %v602 = vsub.s32 3, %v601
    %v603 = vrot.slane %v122, %v602
    %v604 = vlaneseq
    %v605 = vshrl.u32 %v604, 7
    %v606 = vsub.s32 7, %v605
    %v607 = vrot.slane %v122, %v606
    %v608 = vlaneseq
    %v609 = vshrl.u32 %v608, 7
    %v610 = vsub.s32 3, %v609
    %v611 = vrot.slane %v579, %v610
    %v612 = vlaneseq
    %v613 = vshrl.u32 %v612, 7
    %v614 = vsub.s32 3, %v613
    %v615 = vrot.slane %v583, %v614
    %v616 = vlaneseq
    %v617 = vshrl.u32 %v616, 7
    %v618 = vsub.s32 3, %v617
    %v619 = vrot.slane %v587, %v618
    %v620 = vlaneseq
    %v621 = vshrl.u32 %v620, 7
    %v622 = vsub.s32 3, %v621
    %v623 = vrot.slane %v591, %v622
    %v624 = vlaneseq
    %v625 = vshrl.u32 %v624, 7
    %v626 = vsub.s32 3, %v625
    %v627 = vrot.slane %v595, %v626
    %v628 = vlaneseq
    %v629 = vshrl.u32 %v628, 7
    %v630 = vsub.s32 3, %v629
    %v631 = vrot.slane %v599, %v630
    %v632 = vlaneseq
    %v633 = vshrl.u32 %v632, 7
    %v634 = vsub.s32 3, %v633
    %v635 = vrot.slane %v603, %v634
    %v636 = vlaneseq
    %v637 = vshrl.u32 %v636, 7
    %v638 = vsub.s32 3, %v637
    %v639 = vrot.slane %v607, %v638
    %vm640 = vcmp.eq.s32.totalorder %v611, 1
    %vm641 = vcmp.eq.s32.totalorder %v615, 1
    %vm642 = vcmp.eq.s32.totalorder %v619, 1
    %vm643 = vcmp.eq.s32.totalorder %v623, 1
    %vm644 = vcmp.eq.s32.totalorder %v627, 1
    %vm645 = vcmp.eq.s32.totalorder %v631, 1
    %vm646 = vcmp.eq.s32.totalorder %v635, 1
    %vm647 = vcmp.eq.s32.totalorder %v639, 1
    %v648 = vsel %vm640, %v574, 0.0
    %v649 = vsel %vm641, %v573, 0.0
    %v650 = vsel %vm642, %v572, 0.0
    %v651 = vsel %vm643, %v571, 0.0
    %v652 = vsel %vm644, %v570, 0.0
    %v653 = vsel %vm645, %v569, 0.0
    %v654 = vsel %vm646, %v568, 0.0
    %v655 = vsel %vm647, %v575, 0.0
    %v664 = vcombine.low %v648, %v649
    %v665 = vcombine.low %v650, %v651
    %v667 = vunpack.c.l.s4 1983009808
    %v668 = vunpack.c.0.s8 %v667
    %v669 = vlaneseq
    %v670 = vshrl.u32 %v669, 7
    %v671 = vsub.s32 %v668, %v670
    %v672 = vrot.slane %v664, %v671
    %v674 = vunpack.c.l.s4 1983009808
    %v675 = vunpack.c.0.s8 %v674
    %v676 = vlaneseq
    %v677 = vshrl.u32 %v676, 7
    %v678 = vsub.s32 %v675, %v677
    %v679 = vrot.slane %v665, %v678
    %v680 = vcombine.low %v672, %v679
    %v681 = vcombine.low %v652, %v653
    %v682 = vcombine.low %v654, %v655
    %v684 = vunpack.c.l.s4 1983009808
    %v685 = vunpack.c.0.s8 %v684
    %v686 = vlaneseq
    %v687 = vshrl.u32 %v686, 7
    %v688 = vsub.s32 %v685, %v687
    %v689 = vrot.slane %v681, %v688
    %v691 = vunpack.c.l.s4 1983009808
    %v692 = vunpack.c.0.s8 %v691
    %v693 = vlaneseq
    %v694 = vshrl.u32 %v693, 7
    %v695 = vsub.s32 %v692, %v694
    %v696 = vrot.slane %v682, %v695
    %v697 = vcombine.low %v689, %v696
    %700 = vst [vmem:[#allocation7 + $0x40] sm:$0xff] %v680
    %701 = vst [vmem:[#allocation7 + $0x48] sm:$0xff] %v697
    // Predicated region
    $region18: #{tpu_custom_call.1} parent=1 // pred_check
      _
    $region19: #{tpu_custom_call.1} parent=1 // pred_check_branch
      %703 = sbr.rel (0) target = $region21
    $region20: #{tpu_custom_call.1} parent=1 // pred_region
      %s705 = ssub.s32 1280, 1280
      %706 = vsyncadd [#allocation4], %s705
      %s708 = sshll.u32 [#allocation7], 4
      %s709 = int_to_ptr.vmem [resolvable:$true] %s708
      %711 = dma.vmem_to_hbm [thread:$0]  %s709, 1280, %s2, [#allocation4]
    $region21: #{tpu_custom_call.1} parent=1 // pred_fallthru
      _
    // Predicated region
    $region22: #{tpu_custom_call.1} parent=1 // pred_check
      _
    $region23: #{tpu_custom_call.1} parent=1 // pred_check_branch
      %713 = sbr.rel (0) target = $region25
    $region24: #{tpu_custom_call.1} parent=1 // pred_region
      %714 = dma.done [#allocation4], 1280
    $region25: #{tpu_custom_call.1} parent=1 // pred_fallthru
      _
    %715 = vsyncpa [#allocation3], 1
    %716 = vsyncpa [#allocation6], 1
    %717 = vsyncpa [#allocation4], 1

</llo_original>
